<compile_context>
chip_gen: v7x
topology: tpu7x:2x2x1
jax: 0.10.0
libtpu: 0.0.40
codegen_flags: <defaults>
</compile_context>

<pallas_src>
import functools
from typing import NamedTuple, Optional

import jax
import jax.numpy as jnp
from jax.experimental import pallas as pl
from jax.experimental.pallas import tpu as pltpu


class EnsembleMeta(NamedTuple):
    P: int
    D_in: int
    H: int
    D_out: int
    n_hidden: int
    N: int        # = P * D_out  (logical output width)
    N_pad: int    # N rounded up to a multiple of 128 lanes


# --------------------------------------------------------------------------
# Kernel
# --------------------------------------------------------------------------
def _make_ensemble_kernel(n_hidden: int):
    """Kernel factory: hidden-layer trip count is static (unrolled)."""

    def kernel(*refs):
        if n_hidden > 0:
            x_ref, w1_ref, b1_ref, wh_ref, bh_ref, wo_ref, bo_ref, y_ref = refs
        else:
            x_ref, w1_ref, b1_ref, wo_ref, bo_ref, y_ref = refs
            wh_ref = bh_ref = None

        w_dtype = w1_ref.dtype                       # f32 or bf16 (flag-gated)
        x = x_ref[...].astype(w_dtype)               # (Bt, D_in)

        # Layer 1, fused across members: (Bt, D_in) @ (D_in, P*H) -> (Bt, P*H)
        h = jnp.dot(x, w1_ref[...], preferred_element_type=jnp.float32)
        h = jnp.maximum(h + b1_ref[...], 0.0)        # bias/ReLU in f32

        # Hidden layers, block-diagonal across members: (Bt, P*H) @ (P*H, P*H)
        for l in range(n_hidden):
            h = jnp.dot(h.astype(w_dtype), wh_ref[l],
                        preferred_element_type=jnp.float32)
            h = jnp.maximum(h + bh_ref[l], 0.0)      # bh_ref[l]: (1, P*H)

        # Output layer, block-diagonal: (Bt, P*H) @ (P*H, N_pad) -> (Bt, N_pad)
        y = jnp.dot(h.astype(w_dtype), wo_ref[...],
                    preferred_element_type=jnp.float32) + bo_ref[...]

        # Single lane-dense (multiple-of-128) store.
        y_ref[...] = y.astype(y_ref.dtype)

    return kernel


# --------------------------------------------------------------------------
# One-time parameter packing (NOT in the per-call hot path)
# --------------------------------------------------------------------------
def pack_ensemble_params(params, weight_dtype=jnp.float32):
    """Pack raw per-member params into fused, lane-dense, p-major slabs."""
    w1, b1, wh, bh, wo, bo = params
    P, D_in, H = w1.shape
    D_out = wo.shape[-1]
    n_hidden = 0 if wh is None else int(wh.shape[1])
    PH = P * H
    N = P * D_out
    N_pad = ((N + 127) // 128) * 128     # lane-dense output columns

    def block_diag(w):                    # (P, K, M) -> (P*K, P*M), p-major blocks
        Pp, K, M = w.shape
        eye = jnp.eye(Pp, dtype=w.dtype)
        return jnp.einsum('pq,pkm->pkqm', eye, w).reshape(Pp * K, Pp * M)

    # Shared-x first layer: (P, D_in, H) -> (D_in, P*H), p-major columns.
    w1_all = jnp.transpose(w1, (1, 0, 2)).reshape(D_in, PH).astype(weight_dtype)
    b1_all = b1.reshape(1, PH).astype(jnp.float32)               # p-major ✓

    if n_hidden > 0:
        wh_bd = jnp.stack([block_diag(wh[:, l]) for l in range(n_hidden)],
                          axis=0).astype(weight_dtype)            # (n_hidden, PH, PH)
        # bh: (P, n_hidden, 1, H) -> (n_hidden, 1, P*H), p-major columns.
        bh_all = jnp.transpose(bh, (1, 2, 0, 3)).reshape(
            n_hidden, 1, PH).astype(jnp.float32)
    else:
        wh_bd = None
        bh_all = None

    # Output layer block-diag + zero-pad columns to N_pad (unmasked stores).
    wo_bd = block_diag(wo)                                        # (PH, N)
    wo_bd = jnp.pad(wo_bd, ((0, 0), (0, N_pad - N))).astype(weight_dtype)
    bo_all = jnp.pad(bo.reshape(1, N),
                     ((0, 0), (0, N_pad - N))).astype(jnp.float32)

    meta = EnsembleMeta(P=P, D_in=D_in, H=H, D_out=D_out,
                        n_hidden=n_hidden, N=N, N_pad=N_pad)
    return (w1_all, b1_all, wh_bd, bh_all, wo_bd, bo_all), meta


# --------------------------------------------------------------------------
# Forward wrapper
# --------------------------------------------------------------------------
@functools.partial(jax.jit, static_argnums=(2,))
def ensemble_forward(x, packed_params, meta: EnsembleMeta):
    """x: (B, D_in) f32. Returns dict like the PyTorch module."""
    w1_all, b1_all, wh_bd, bh_all, wo_bd, bo_all = packed_params
    B, D_in = x.shape
    P, H = meta.P, meta.H
    n_hidden, N, N_pad = meta.n_hidden, meta.N, meta.N_pad
    PH = P * H

    # Batch tiling: single tile at small B; parallel tiles (megacore on v7x)
    # and bounded VMEM footprint once B grows.
    block_b = B
    for cand in (512, 256):
        if B > cand and B % cand == 0:
            block_b = cand
            break
    grid = (B // block_b,)

    def full(shape):  # whole-array operand, resident across all grid steps
        return pl.BlockSpec(shape, lambda i, _n=len(shape): (0,) * _n)

    in_specs = [pl.BlockSpec((block_b, D_in), lambda i: (i, 0)),
                full((D_in, PH)),
                full((1, PH))]
    args = [x, w1_all, b1_all]
    if n_hidden > 0:
        in_specs += [full((n_hidden, PH, PH)), full((n_hidden, 1, PH))]
        args += [wh_bd, bh_all]
    in_specs += [full((PH, N_pad)), full((1, N_pad))]
    args += [wo_bd, bo_all]

    y_pad = pl.pallas_call(
        _make_ensemble_kernel(n_hidden),
        out_shape=jax.ShapeDtypeStruct((B, N_pad), jnp.float32),
        grid=grid,
        in_specs=in_specs,
        out_specs=pl.BlockSpec((block_b, N_pad), lambda i: (i, 0)),
        compiler_params=pltpu.CompilerParams(
            dimension_semantics=("parallel",)),
    )(*args)

    y_p = y_pad[:, :N] if N_pad != N else y_pad
    # x.repeat(1, P): pure replication — kept outside the kernel (trivial XLA
    # copy that overlaps with the Pallas call).
    x_p = jnp.tile(x, (1, P))
    return {"output-parallel": y_p, "input-parallel": x_p}


# --------------------------------------------------------------------------
# Init + pure-JAX reference (PyTorch semantics)
# --------------------------------------------------------------------------
def init_ensemble_params(key, input_size, output_size, hid_size, num_layers,
                         n_parallel):
    """Deterministic PyTorch-nn.Linear-style init."""
    assert num_layers > 0
    n_hidden = num_layers - 1
    ks = jax.random.split(key, 6)

    def u(k, shape, fan_in):
        bound = 1.0 / jnp.sqrt(jnp.float32(fan_in))
        return jax.random.uniform(k, shape, jnp.float32, -bound, bound)

    w1 = u(ks[0], (n_parallel, input_size, hid_size), input_size)
    b1 = u(ks[1], (n_parallel, 1, hid_size), input_size)
    if n_hidden > 0:
        wh = u(ks[2], (n_parallel, n_hidden, hid_size, hid_size), hid_size)
        bh = u(ks[3], (n_parallel, n_hidden, 1, hid_size), hid_size)
    else:
        wh, bh = None, None
    wo = u(ks[4], (n_parallel, hid_size, output_size), hid_size)
    bo = u(ks[5], (n_parallel, 1, output_size), hid_size)
    return (w1, b1, wh, bh, wo, bo)


def reference_forward(x, params):
    w1, b1, wh, bh, wo, bo = params
    P = w1.shape[0]
    n_hidden = 0 if wh is None else wh.shape[1]
    outs = []
    for p in range(P):
        h = jnp.maximum(x @ w1[p] + b1[p], 0.0)
        for l in range(n_hidden):
            h = jnp.maximum(h @ wh[p, l] + bh[p, l], 0.0)
        outs.append(h @ wo[p] + bo[p])
    return {"output-parallel": jnp.concatenate(outs, axis=1),
            "input-parallel": jnp.tile(x, (1, P))}


# --------------------------------------------------------------------------
if __name__ == "__main__":
    batch = 8
    input_size = 32
    hid_size = 32
    output_size = 8
    num_layers = 3      # 1 input Linear+ReLU, 2 hidden Linear+ReLU, 1 output Linear
    n_parallel = 3

    key = jax.random.PRNGKey(0)
    k_param, k_x = jax.random.split(key)
    params = init_ensemble_params(k_param, input_size, output_size,
                                  hid_size, num_layers, n_parallel)
    x = jax.random.normal(k_x, (batch, input_size), jnp.float32)

    # One-time packing (block-diagonal, p-major, lane-dense, padded outputs).
    packed, meta = pack_ensemble_params(params)

    out = ensemble_forward(x, packed, meta)
    jax.block_until_ready(out["output-parallel"])
    jax.block_until_ready(out["input-parallel"])

    # Parity vs the pure-JAX (PyTorch-semantics) reference — also guards the
    # p-major block-diagonal ordering (cross-wired members would fail here).
    ref = reference_forward(x, params)
    assert out["output-parallel"].shape == (batch, n_parallel * output_size)
    assert out["input-parallel"].shape == (batch, n_parallel * input_size)
    assert jnp.allclose(out["output-parallel"], ref["output-parallel"],
                        atol=1e-5, rtol=1e-5)
    assert jnp.allclose(out["input-parallel"], ref["input-parallel"])

    # num_layers == 1 variant: kernel is built WITHOUT hidden operands.
    params1 = init_ensemble_params(k_param, input_size, output_size,
                                   hid_size, 1, n_parallel)
    packed1, meta1 = pack_ensemble_params(params1)
    out1 = ensemble_forward(x, packed1, meta1)
    ref1 = reference_forward(x, params1)
    jax.block_until_ready(out1["output-parallel"])
    assert jnp.allclose(out1["output-parallel"], ref1["output-parallel"],
                        atol=1e-5, rtol=1e-5)

    # Flag-gated bf16-at-the-dot variant (f32 accumulate + f32 bias/ReLU);
    # relaxed tolerance vs the f32 reference.
    packed_bf16, meta_bf16 = pack_ensemble_params(params,
                                                  weight_dtype=jnp.bfloat16)
    out_bf16 = ensemble_forward(x, packed_bf16, meta_bf16)
    jax.block_until_ready(out_bf16["output-parallel"])
    assert jnp.allclose(out_bf16["output-parallel"], ref["output-parallel"],
                        atol=1e-1, rtol=1e-1)

    print("KERNEL_OK")
</pallas_src>

<mosaic_0001>
module attributes {stable_mosaic.version = 11 : i64} {
  func.func @kernel(%arg0: i32, %arg1: memref<8x32xf32, #tpu.memory_space<vmem>>, %arg2: memref<32x96xf32, #tpu.memory_space<vmem>>, %arg3: memref<1x96xf32, #tpu.memory_space<vmem>>, %arg4: memref<2x96x96xf32, #tpu.memory_space<vmem>>, %arg5: memref<2x1x96xf32, #tpu.memory_space<vmem>>, %arg6: memref<96x128xf32, #tpu.memory_space<vmem>>, %arg7: memref<1x128xf32, #tpu.memory_space<vmem>>, %arg8: memref<8x128xf32, #tpu.memory_space<vmem>>) attributes {dimension_semantics = [#tpu.dimension_semantics<parallel>], iteration_bounds = array<i64: 1>, scalar_prefetch = 0 : i64, scratch_operands = 0 : i64, tpu.core_type = #tpu.core_type<tc>, window_params = [{transform_indices = @transform_0, window_bounds = array<i64: 8, 32>}, {pipeline_mode = #tpu.pipeline_mode<synchronous>, transform_indices = @transform_1, window_bounds = array<i64: 32, 96>}, {pipeline_mode = #tpu.pipeline_mode<synchronous>, transform_indices = @transform_2, window_bounds = array<i64: 1, 96>}, {pipeline_mode = #tpu.pipeline_mode<synchronous>, transform_indices = @transform_3, window_bounds = array<i64: 2, 96, 96>}, {pipeline_mode = #tpu.pipeline_mode<synchronous>, transform_indices = @transform_4, window_bounds = array<i64: 2, 1, 96>}, {pipeline_mode = #tpu.pipeline_mode<synchronous>, transform_indices = @transform_5, window_bounds = array<i64: 96, 128>}, {pipeline_mode = #tpu.pipeline_mode<synchronous>, transform_indices = @transform_6, window_bounds = array<i64: 1, 128>}, {transform_indices = @transform_7, window_bounds = array<i64: 8, 128>}]} {
    %c0 = arith.constant 0 : index
    %c0_0 = arith.constant 0 : index
    %0 = vector.load %arg1[%c0, %c0_0] : memref<8x32xf32, #tpu.memory_space<vmem>>, vector<8x32xf32>
    %c0_1 = arith.constant 0 : index
    %c0_2 = arith.constant 0 : index
    %1 = vector.load %arg2[%c0_1, %c0_2] : memref<32x96xf32, #tpu.memory_space<vmem>>, vector<32x96xf32>
    %cst = arith.constant dense<0.000000e+00> : vector<8x96xf32>
    %2 = tpu.matmul %0, %1, %cst {dimension_numbers = #tpu.dot_dimension_numbers<[1], [0], [0], [1], [0, 0, 1, 1], [], []>} : vector<8x32xf32>, vector<32x96xf32>, vector<8x96xf32> -> vector<8x96xf32>
    %c0_3 = arith.constant 0 : index
    %c0_4 = arith.constant 0 : index
    %3 = vector.load %arg3[%c0_3, %c0_4] : memref<1x96xf32, #tpu.memory_space<vmem>>, vector<1x96xf32>
    %4 = vector.broadcast %3 : vector<1x96xf32> to vector<8x96xf32>
    %5 = arith.addf %2, %4 : vector<8x96xf32>
    %cst_5 = arith.constant 0.000000e+00 : f32
    %6 = vector.broadcast %cst_5 : f32 to vector<8x96xf32>
    %7 = arith.maximumf %5, %6 : vector<8x96xf32>
    %c0_6 = arith.constant 0 : index
    %c0_7 = arith.constant 0 : index
    %c0_8 = arith.constant 0 : index
    %8 = vector.load %arg4[%c0_6, %c0_7, %c0_8] : memref<2x96x96xf32, #tpu.memory_space<vmem>>, vector<1x96x96xf32>
    %9 = vector.shape_cast %8 : vector<1x96x96xf32> to vector<96x96xf32>
    %cst_9 = arith.constant dense<0.000000e+00> : vector<8x96xf32>
    %10 = tpu.matmul %7, %9, %cst_9 {dimension_numbers = #tpu.dot_dimension_numbers<[1], [0], [0], [1], [0, 0, 1, 1], [], []>} : vector<8x96xf32>, vector<96x96xf32>, vector<8x96xf32> -> vector<8x96xf32>
    %c0_10 = arith.constant 0 : index
    %c0_11 = arith.constant 0 : index
    %c0_12 = arith.constant 0 : index
    %11 = vector.load %arg5[%c0_10, %c0_11, %c0_12] : memref<2x1x96xf32, #tpu.memory_space<vmem>>, vector<1x1x96xf32>
    %12 = vector.shape_cast %11 : vector<1x1x96xf32> to vector<1x96xf32>
    %13 = vector.broadcast %12 : vector<1x96xf32> to vector<8x96xf32>
    %14 = arith.addf %10, %13 : vector<8x96xf32>
    %cst_13 = arith.constant 0.000000e+00 : f32
    %15 = vector.broadcast %cst_13 : f32 to vector<8x96xf32>
    %16 = arith.maximumf %14, %15 : vector<8x96xf32>
    %c1 = arith.constant 1 : index
    %c0_14 = arith.constant 0 : index
    %c0_15 = arith.constant 0 : index
    %17 = vector.load %arg4[%c1, %c0_14, %c0_15] : memref<2x96x96xf32, #tpu.memory_space<vmem>>, vector<1x96x96xf32>
    %18 = vector.shape_cast %17 : vector<1x96x96xf32> to vector<96x96xf32>
    %cst_16 = arith.constant dense<0.000000e+00> : vector<8x96xf32>
    %19 = tpu.matmul %16, %18, %cst_16 {dimension_numbers = #tpu.dot_dimension_numbers<[1], [0], [0], [1], [0, 0, 1, 1], [], []>} : vector<8x96xf32>, vector<96x96xf32>, vector<8x96xf32> -> vector<8x96xf32>
    %c1_17 = arith.constant 1 : index
    %c0_18 = arith.constant 0 : index
    %c0_19 = arith.constant 0 : index
    %20 = vector.load %arg5[%c1_17, %c0_18, %c0_19] : memref<2x1x96xf32, #tpu.memory_space<vmem>>, vector<1x1x96xf32>
    %21 = vector.shape_cast %20 : vector<1x1x96xf32> to vector<1x96xf32>
    %22 = vector.broadcast %21 : vector<1x96xf32> to vector<8x96xf32>
    %23 = arith.addf %19, %22 : vector<8x96xf32>
    %cst_20 = arith.constant 0.000000e+00 : f32
    %24 = vector.broadcast %cst_20 : f32 to vector<8x96xf32>
    %25 = arith.maximumf %23, %24 : vector<8x96xf32>
    %c0_21 = arith.constant 0 : index
    %c0_22 = arith.constant 0 : index
    %26 = vector.load %arg6[%c0_21, %c0_22] : memref<96x128xf32, #tpu.memory_space<vmem>>, vector<96x128xf32>
    %cst_23 = arith.constant dense<0.000000e+00> : vector<8x128xf32>
    %27 = tpu.matmul %25, %26, %cst_23 {dimension_numbers = #tpu.dot_dimension_numbers<[1], [0], [0], [1], [0, 0, 1, 1], [], []>} : vector<8x96xf32>, vector<96x128xf32>, vector<8x128xf32> -> vector<8x128xf32>
    %c0_24 = arith.constant 0 : index
    %c0_25 = arith.constant 0 : index
    %28 = vector.load %arg7[%c0_24, %c0_25] : memref<1x128xf32, #tpu.memory_space<vmem>>, vector<1x128xf32>
    %29 = vector.broadcast %28 : vector<1x128xf32> to vector<8x128xf32>
    %30 = arith.addf %27, %29 : vector<8x128xf32>
    %c0_26 = arith.constant 0 : index
    %c0_27 = arith.constant 0 : index
    %31 = vector.load %arg8[%c0_26, %c0_27] : memref<8x128xf32, #tpu.memory_space<vmem>>, vector<8x128xf32>
    tpu.vector_store %arg8[%c0_26, %c0_27], %30 {strides = array<i32>} : memref<8x128xf32, #tpu.memory_space<vmem>>, vector<8x128xf32>,
    return
  }
  func.func @transform_0(%arg0: i32) -> (i32, i32) {
    %c0_i32 = arith.constant 0 : i32
    %c0_i32_0 = arith.constant 0 : i32
    return %arg0, %c0_i32 : i32, i32
  }
  func.func @transform_1(%arg0: i32) -> (i32, i32) {
    %c0_i32 = arith.constant 0 : i32
    %c0_i32_0 = arith.constant 0 : i32
    %c0_i32_1 = arith.constant 0 : i32
    return %c0_i32, %c0_i32_0 : i32, i32
  }
  func.func @transform_2(%arg0: i32) -> (i32, i32) {
    %c0_i32 = arith.constant 0 : i32
    %c0_i32_0 = arith.constant 0 : i32
    %c0_i32_1 = arith.constant 0 : i32
    return %c0_i32, %c0_i32_0 : i32, i32
  }
  func.func @transform_3(%arg0: i32) -> (i32, i32, i32) {
    %c0_i32 = arith.constant 0 : i32
    %c0_i32_0 = arith.constant 0 : i32
    %c0_i32_1 = arith.constant 0 : i32
    %c0_i32_2 = arith.constant 0 : i32
    return %c0_i32, %c0_i32_0, %c0_i32_1 : i32, i32, i32
  }
  func.func @transform_4(%arg0: i32) -> (i32, i32, i32) {
    %c0_i32 = arith.constant 0 : i32
    %c0_i32_0 = arith.constant 0 : i32
    %c0_i32_1 = arith.constant 0 : i32
    %c0_i32_2 = arith.constant 0 : i32
    return %c0_i32, %c0_i32_0, %c0_i32_1 : i32, i32, i32
  }
  func.func @transform_5(%arg0: i32) -> (i32, i32) {
    %c0_i32 = arith.constant 0 : i32
    %c0_i32_0 = arith.constant 0 : i32
    %c0_i32_1 = arith.constant 0 : i32
    return %c0_i32, %c0_i32_0 : i32, i32
  }
  func.func @transform_6(%arg0: i32) -> (i32, i32) {
    %c0_i32 = arith.constant 0 : i32
    %c0_i32_0 = arith.constant 0 : i32
    %c0_i32_1 = arith.constant 0 : i32
    return %c0_i32, %c0_i32_0 : i32, i32
  }
  func.func @transform_7(%arg0: i32) -> (i32, i32) {
    %c0_i32 = arith.constant 0 : i32
    %c0_i32_0 = arith.constant 0 : i32
    return %arg0, %c0_i32 : i32, i32
  }
}

</mosaic_0001>

<llo_original>
// kernel: tile.9
$region0: #{tile.9}
  %s0 = inlined_call_operand.vmem [shape: f32[8,3,32], index: 0, kind: input, shape index: {}]
  %s1 = inlined_call_operand.hbm [shape: f32[8,96], index: 1, kind: output, shape index: {}]
  $region1: #{tile.9} parent=0
    #allocation0 [shape = 'u8[4096]{0}', space=vmem, size = 0x1000, scoped, tag = 'operand span for operand 1']
    #allocation1 [shape = 's32[1]{0}', space=sflag, size = 0x4, scoped, tag = 'scoped memory for tile.9']
    #allocation2 [shape = 'u8[32768]{0}', space=vmem, size = 0x8000, scoped, tag = 'scoped mem for input reshape']
    %2 = vsyncpa [#allocation1], 0
    %s4 = sshllo.u32 0, 4
    %s5 = smul.addr 4, 7
    %s6 = scalar_lea.vmem %s0, %s5
    %v7 = vld [vmem:[%s6] sm:%s4]
    %s8 = scalar_lea.vmem [#allocation2], 56
    %9 = vst [vmem:[%s8] sm:%s4] %v7
    %s10 = smul.addr 4, 6
    %s11 = scalar_lea.vmem %s0, %s10
    %v12 = vld [vmem:[%s11] sm:%s4]
    %s13 = scalar_lea.vmem [#allocation2], 48
    %14 = vst [vmem:[%s13] sm:%s4] %v12
    %s15 = smul.addr 4, 5
    %s16 = scalar_lea.vmem %s0, %s15
    %v17 = vld [vmem:[%s16] sm:%s4]
    %s18 = scalar_lea.vmem [#allocation2], 40
    %19 = vst [vmem:[%s18] sm:%s4] %v17
    %s20 = smul.addr 4, 4
    %s21 = scalar_lea.vmem %s0, %s20
    %v22 = vld [vmem:[%s21] sm:%s4]
    %s23 = scalar_lea.vmem [#allocation2], 32
    %24 = vst [vmem:[%s23] sm:%s4] %v22
    %s25 = smul.addr 4, 3
    %s26 = scalar_lea.vmem %s0, %s25
    %v27 = vld [vmem:[%s26] sm:%s4]
    %s28 = scalar_lea.vmem [#allocation2], 24
    %29 = vst [vmem:[%s28] sm:%s4] %v27
    %s30 = smul.addr 4, 2
    %s31 = scalar_lea.vmem %s0, %s30
    %v32 = vld [vmem:[%s31] sm:%s4]
    %s33 = scalar_lea.vmem [#allocation2], 16
    %34 = vst [vmem:[%s33] sm:%s4] %v32
    %s35 = scalar_lea.vmem %s0, 4
    %v36 = vld [vmem:[%s35] sm:%s4]
    %s37 = scalar_lea.vmem [#allocation2], 8
    %38 = vst [vmem:[%s37] sm:%s4] %v36
    %v39 = vld [vmem:[%s0] sm:%s4]
    %40 = vst [vmem:[#allocation2] sm:%s4] %v39
    %v41 = vld [vmem:[#allocation2] ss:$8 sm:$0xf]
    %v42 = vld [vmem:[#allocation2] ss:$8 sm:$0xf0]
    %vm43 = vcmask 1047556
    %v44 = vsel %vm43, %v42, %v41
    %vm45 = vcmask 261120
    %46 = vst.msk [vmem:[#allocation0] sm:$0xff] %vm45, %v44
    %s47 = scalar_lea.vmem [#allocation2], 2
    %v48 = vld [vmem:[%s47] ss:$8 sm:$0xf]
    %s49 = scalar_lea.vmem [#allocation2], 2
    %v50 = vld [vmem:[%s49] ss:$8 sm:$0xf0]
    %vm51 = vcmask 1047556
    %v52 = vsel %vm51, %v50, %v48
    %53 = vrot.lane.b32.xlu0 %v52, 64
    %v54 = vpop.permute.xlu0 %53
    %vm55 = vcmask 785920
    %56 = vst.msk [vmem:[#allocation0] sm:$0xff] %vm55, %v54
    %s57 = scalar_lea.vmem [#allocation2], 1
    %v58 = vld [vmem:[%s57] ss:$8 sm:$0xf]
    %s59 = scalar_lea.vmem [#allocation2], 1
    %v60 = vld [vmem:[%s59] ss:$8 sm:$0xf0]
    %vm61 = vcmask 1047556
    %v62 = vsel %vm61, %v60, %v58
    %63 = vrot.lane.b32.xlu0 %v62, 32
    %v64 = vpop.permute.xlu0 %63
    %vm65 = vcmask 523520
    %66 = vst.msk [vmem:[#allocation0] sm:$0xff] %vm65, %v64
    %s68 = ssub.s32 128, 128
    %69 = vsyncadd [#allocation1], %s68
    %s71 = sshll.u32 [#allocation0], 4
    %s72 = int_to_ptr.vmem [resolvable:$true] %s71
    %74 = dma.vmem_to_hbm [thread:$0]  %s72, 128, %s1, [#allocation1]
    %75 = dma.done [#allocation1], 128
    %76 = vsyncpa [#allocation1], 1

// kernel: ensemble_forward.1
$region0: #{ensemble_forward.1}
  #allocation0 [shape = 'u32[]', space=smem, size = 0x4, offset = 0x4, fixed_abs, tag = 'smem constant byte address 0x4 - core index']
  #allocation1 [shape = 'u32[144,128]{1,0:T(1,128)}', space=vmem, size = 0x12000, scoped, tag = 'internal scratch']
  %s0 = inlined_call_operand.vmem [shape: f32[8,32], index: 0, kind: input, shape index: {}]
  %s1 = inlined_call_operand.vmem [shape: f32[32,96], index: 1, kind: input, shape index: {}]
  %s2 = inlined_call_operand.vmem [shape: f32[1,96], index: 2, kind: input, shape index: {}]
  %s3 = inlined_call_operand.hbm [shape: f32[2,96,96], index: 3, kind: input, shape index: {}]
  %s4 = inlined_call_operand.vmem [shape: f32[2,1,96], index: 4, kind: input, shape index: {}]
  %s5 = inlined_call_operand.hbm [shape: f32[96,128], index: 5, kind: input, shape index: {}]
  %s6 = inlined_call_operand.vmem [shape: f32[1,128], index: 6, kind: input, shape index: {}]
  %s7 = inlined_call_operand.hbm [shape: f32[8,128], index: 7, kind: output, shape index: {}]
  %s8 = sld [smem:[#allocation0]]
  $region46: #{ensemble_forward.1} parent=0
    _
  %s10 = ssub.s32 1, %s8
  %s11 = scalar_select 0, %s10, %s8
  $region1: #{ensemble_forward.1} parent=0
    #allocation2 [shape = 'u8[98304]{0}', space=vmem, size = 0x18000, scoped, tag = 'input window, operand 3, single buffered']
    #allocation3 [shape = 's32[1]{0}', space=sflag, size = 0x4, scoped, tag = 'scoped memory for ensemble_forward.1']
    #allocation4 [shape = 's32[1]{0}', space=sflag, size = 0x4, scoped, tag = 'scoped memory for ensemble_forward.1']
    #allocation5 [shape = 'u8[49152]{0}', space=vmem, size = 0xc000, scoped, tag = 'input window, operand 5, single buffered']
    #allocation6 [shape = 's32[1]{0}', space=sflag, size = 0x4, scoped, tag = 'scoped memory for ensemble_forward.1']
    #allocation7 [shape = 'u8[4096]{0}', space=vmem, size = 0x1000, scoped, tag = 'output window, operand 0, single buffered']
    %12 = vsyncpa [#allocation3], 0
    %13 = vsyncpa [#allocation6], 0
    %14 = vsyncpa [#allocation4], 0
    // Predicated region
    $region2: #{ensemble_forward.1} parent=1 // pred_check
      _
    $region3: #{ensemble_forward.1} parent=1 // pred_check_branch
      %16 = sbr.rel (0) target = $region5
    $region4: #{ensemble_forward.1} parent=1 // pred_region
      _
    $region5: #{ensemble_forward.1} parent=1 // pred_fallthru
      _
    // Predicated region
    $region6: #{ensemble_forward.1} parent=1 // pred_check
      _
    $region7: #{ensemble_forward.1} parent=1 // pred_check_branch
      %18 = sbr.rel (0) target = $region9
    $region8: #{ensemble_forward.1} parent=1 // pred_region
      _
    $region9: #{ensemble_forward.1} parent=1 // pred_fallthru
      _
    // Predicated region
    $region10: #{ensemble_forward.1} parent=1 // pred_check
      _
    $region11: #{ensemble_forward.1} parent=1 // pred_check_branch
      %20 = sbr.rel (0) target = $region13
    $region12: #{ensemble_forward.1} parent=1 // pred_region
      _
    $region13: #{ensemble_forward.1} parent=1 // pred_fallthru
      _
    // Predicated region
    $region14: #{ensemble_forward.1} parent=1 // pred_check
      _
    $region15: #{ensemble_forward.1} parent=1 // pred_check_branch
      %22 = sbr.rel (0) target = $region17
    $region16: #{ensemble_forward.1} parent=1 // pred_region
      %s24 = ssub.s32 3072, 3072
      %25 = vsyncadd [#allocation3], %s24
      %s26 = sshll.u32 [#allocation2], 4
      %s27 = int_to_ptr.vmem [resolvable:$true] %s26
      %32 = dma.hbm_to_vmem [thread:$0]  %s3, 3072, %s27, [#allocation3], 128, 128, 8
    $region17: #{ensemble_forward.1} parent=1 // pred_fallthru
      _
    // Predicated region
    $region18: #{ensemble_forward.1} parent=1 // pred_check
      _
    $region19: #{ensemble_forward.1} parent=1 // pred_check_branch
      %34 = sbr.rel (0) target = $region21
    $region20: #{ensemble_forward.1} parent=1 // pred_region
      _
    $region21: #{ensemble_forward.1} parent=1 // pred_fallthru
      _
    // Predicated region
    $region22: #{ensemble_forward.1} parent=1 // pred_check
      _
    $region23: #{ensemble_forward.1} parent=1 // pred_check_branch
      %36 = sbr.rel (0) target = $region25
    $region24: #{ensemble_forward.1} parent=1 // pred_region
      %s38 = ssub.s32 1536, 1536
      %39 = vsyncadd [#allocation6], %s38
      %s40 = sshll.u32 [#allocation5], 4
      %s41 = int_to_ptr.vmem [resolvable:$true] %s40
      %46 = dma.hbm_to_vmem [thread:$0]  %s5, 1536, %s41, [#allocation6], 128, 128, 8
    $region25: #{ensemble_forward.1} parent=1 // pred_fallthru
      _
    // Predicated region
    $region26: #{ensemble_forward.1} parent=1 // pred_check
      _
    $region27: #{ensemble_forward.1} parent=1 // pred_check_branch
      %48 = sbr.rel (0) target = $region29
    $region28: #{ensemble_forward.1} parent=1 // pred_region
      _
    $region29: #{ensemble_forward.1} parent=1 // pred_fallthru
      _
    // Predicated region
    $region30: #{ensemble_forward.1} parent=1 // pred_check
      _
    $region31: #{ensemble_forward.1} parent=1 // pred_check_branch
      %50 = sbr.rel (0) target = $region33
    $region32: #{ensemble_forward.1} parent=1 // pred_region
      %51 = dma.done [#allocation3], 3072
    $region33: #{ensemble_forward.1} parent=1 // pred_fallthru
      _
    // Predicated region
    $region34: #{ensemble_forward.1} parent=1 // pred_check
      _
    $region35: #{ensemble_forward.1} parent=1 // pred_check_branch
      %53 = sbr.rel (0) target = $region37
    $region36: #{ensemble_forward.1} parent=1 // pred_region
      %54 = dma.done [#allocation6], 1536
    $region37: #{ensemble_forward.1} parent=1 // pred_fallthru
      _
    %v55 = vld [vmem:[%s0] sm:$0xff]
    %v56 = vld [vmem:[%s1] sm:$0xff]
    %v57 = vld [vmem:[%s1 + $0x8] sm:$0xff]
    %v58 = vld [vmem:[%s1 + $0x10] sm:$0xff]
    %v59 = vld [vmem:[%s1 + $0x18] sm:$0xff]
    %v60 = vld [vmem:[%s2] sm:$0x1]
    %v62 = vlaneseq
    %v63 = vshrl.u32 %v62, 7
    %v64 = vsub.s32 0, %v63
    %v65 = vrot.slane %v60, %v64
    %vm67 = vcmask 261120
    %v69 = vsel %vm67, %v55, 0
    %71 = vmatprep.subr.mxu0 0.0
    %72 = vmatpush1.msra.mxu0 %v56
    %73 = vmatprep.subr.mxu0 0.0
    %74 = vmatpush1.msra.mxu0 %v57
    %75 = vmatprep.subr.mxu0 0.0
    %76 = vmatpush1.msra.mxu0 %v58
    %77 = vmatprep.subr.mxu0 0.0
    %78 = vmatpush1.msra.mxu0 %v59
    %79 = vmatprep.subr.mxu0 0.0
    %80 = vmatpush1.msra.mxu0 0.0
    %81 = vmatprep.subr.mxu0 0.0
    %82 = vmatpush1.msra.mxu0 0.0
    %83 = vmatprep.subr.mxu0 0.0
    %84 = vmatpush1.msra.mxu0 0.0
    %85 = vmatprep.subr.mxu0 0.0
    %86 = vmatpush1.msra.mxu0 0.0
    %87 = vmatprep.subr.mxu0 0.0
    %88 = vmatpush1.msra.mxu0 0.0
    %89 = vmatprep.subr.mxu0 0.0
    %90 = vmatpush1.msra.mxu0 0.0
    %91 = vmatprep.subr.mxu0 0.0
    %92 = vmatpush1.msra.mxu0 0.0
    %93 = vmatprep.subr.mxu0 0.0
    %94 = vmatpush1.msra.mxu0 0.0
    %95 = vmatprep.subr.mxu0 0.0
    %96 = vmatpush1.msra.mxu0 0.0
    %97 = vmatprep.subr.mxu0 0.0
    %98 = vmatpush1.msra.mxu0 0.0
    %99 = vmatprep.subr.mxu0 0.0
    %100 = vmatpush1.msra.mxu0 0.0
    %101 = vmatprep.subr.mxu0 0.0
    %102 = vmatpush1.msra.mxu0 0.0
    %103 = vmatprep.subr.mxu0 0.0
    %104 = vmatpush1.msra.mxu0 0.0
    %105 = vmatprep.subr.mxu0 0.0
    %106 = vmatpush1.msra.mxu0 0.0
    %107 = vmatprep.subr.mxu0 0.0
    %108 = vmatpush1.msra.mxu0 0.0
    %109 = vmatprep.subr.mxu0 0.0
    %110 = vmatpush1.msra.mxu0 0.0
    %111 = vmatprep.subr.mxu0 0.0
    %112 = vmatpush1.msra.mxu0 0.0
    %113 = vmatprep.subr.mxu0 0.0
    %114 = vmatpush1.msra.mxu0 0.0
    %115 = vmatprep.subr.mxu0 0.0
    %116 = vmatpush1.msra.mxu0 0.0
    %117 = vmatprep.subr.mxu0 0.0
    %118 = vmatpush1.msra.mxu0 0.0
    %119 = vmatprep.subr.mxu0 0.0
    %120 = vmatpush1.msra.mxu0 0.0
    %121 = vmatprep.subr.mxu0 0.0
    %122 = vmatpush1.msra.mxu0 0.0
    %123 = vmatprep.subr.mxu0 0.0
    %124 = vmatpush1.msra.mxu0 0.0
    %125 = vmatprep.subr.mxu0 0.0
    %126 = vmatpush1.msra.mxu0 0.0
    %127 = vmatprep.subr.mxu0 0.0
    %128 = vmatpush1.msra.mxu0 0.0
    %129 = vmatprep.subr.mxu0 0.0
    %130 = vmatpush1.msra.mxu0 0.0
    %131 = vmatprep.subr.mxu0 0.0
    %132 = vmatpush1.msra.mxu0 0.0
    %133 = vmatprep.subr.mxu0 0.0
    %134 = vmatpush1.msra.mxu0 0.0
    %135 = vmatprep.mubr.f32.mxu0 0.0
    %136 = vmatmul.mubr.f32.gmra.mrb[0].mxu0 %v69
    %v137 = vpop.f32.mrb[0].mxu0
    %v138 = vadd.f32 %v65, %v137
    %v139 = vpop.f32.mrb[0].mxu0
    %140 = vdwg.mxu0
    %v141 = vmax.f32 %v138, 0.0
    %v142 = vld [vmem:[#allocation2] sm:$0xff]
    %v143 = vld [vmem:[#allocation2 + $0x8] sm:$0xff]
    %v144 = vld [vmem:[#allocation2 + $0x10] sm:$0xff]
    %v145 = vld [vmem:[#allocation2 + $0x18] sm:$0xff]
    %v146 = vld [vmem:[#allocation2 + $0x20] sm:$0xff]
    %v147 = vld [vmem:[#allocation2 + $0x28] sm:$0xff]
    %v148 = vld [vmem:[#allocation2 + $0x30] sm:$0xff]
    %v149 = vld [vmem:[#allocation2 + $0x38] sm:$0xff]
    %v150 = vld [vmem:[#allocation2 + $0x40] sm:$0xff]
    %v151 = vld [vmem:[#allocation2 + $0x48] sm:$0xff]
    %v152 = vld [vmem:[#allocation2 + $0x50] sm:$0xff]
    %v153 = vld [vmem:[#allocation2 + $0x58] sm:$0xff]
    %v154 = vld [vmem:[%s4] sm:$0x1]
    %v156 = vlaneseq
    %v157 = vshrl.u32 %v156, 7
    %v158 = vsub.s32 0, %v157
    %v159 = vrot.slane %v154, %v158
    %vm161 = vcmask 785408
    %v163 = vsel %vm161, %v141, 0
    %165 = vmatprep.subr.mxu0 0.0
    %166 = vmatpush1.msra.mxu0 %v142
    %167 = vmatprep.subr.mxu0 0.0
    %168 = vmatpush1.msra.mxu0 %v143
    %169 = vmatprep.subr.mxu0 0.0
    %170 = vmatpush1.msra.mxu0 %v144
    %171 = vmatprep.subr.mxu0 0.0
    %172 = vmatpush1.msra.mxu0 %v145
    %173 = vmatprep.subr.mxu0 0.0
    %174 = vmatpush1.msra.mxu0 %v146
    %175 = vmatprep.subr.mxu0 0.0
    %176 = vmatpush1.msra.mxu0 %v147
    %177 = vmatprep.subr.mxu0 0.0
    %178 = vmatpush1.msra.mxu0 %v148
    %179 = vmatprep.subr.mxu0 0.0
    %180 = vmatpush1.msra.mxu0 %v149
    %181 = vmatprep.subr.mxu0 0.0
    %182 = vmatpush1.msra.mxu0 %v150
    %183 = vmatprep.subr.mxu0 0.0
    %184 = vmatpush1.msra.mxu0 %v151
    %185 = vmatprep.subr.mxu0 0.0
    %186 = vmatpush1.msra.mxu0 %v152
    %187 = vmatprep.subr.mxu0 0.0
    %188 = vmatpush1.msra.mxu0 %v153
    %189 = vmatprep.subr.mxu0 0.0
    %190 = vmatpush1.msra.mxu0 0.0
    %191 = vmatprep.subr.mxu0 0.0
    %192 = vmatpush1.msra.mxu0 0.0
    %193 = vmatprep.subr.mxu0 0.0
    %194 = vmatpush1.msra.mxu0 0.0
    %195 = vmatprep.subr.mxu0 0.0
    %196 = vmatpush1.msra.mxu0 0.0
    %197 = vmatprep.subr.mxu0 0.0
    %198 = vmatpush1.msra.mxu0 0.0
    %199 = vmatprep.subr.mxu0 0.0
    %200 = vmatpush1.msra.mxu0 0.0
    %201 = vmatprep.subr.mxu0 0.0
    %202 = vmatpush1.msra.mxu0 0.0
    %203 = vmatprep.subr.mxu0 0.0
    %204 = vmatpush1.msra.mxu0 0.0
    %205 = vmatprep.subr.mxu0 0.0
    %206 = vmatpush1.msra.mxu0 0.0
    %207 = vmatprep.subr.mxu0 0.0
    %208 = vmatpush1.msra.mxu0 0.0
    %209 = vmatprep.subr.mxu0 0.0
    %210 = vmatpush1.msra.mxu0 0.0
    %211 = vmatprep.subr.mxu0 0.0
    %212 = vmatpush1.msra.mxu0 0.0
    %213 = vmatprep.subr.mxu0 0.0
    %214 = vmatpush1.msra.mxu0 0.0
    %215 = vmatprep.subr.mxu0 0.0
    %216 = vmatpush1.msra.mxu0 0.0
    %217 = vmatprep.subr.mxu0 0.0
    %218 = vmatpush1.msra.mxu0 0.0
    %219 = vmatprep.subr.mxu0 0.0
    %220 = vmatpush1.msra.mxu0 0.0
    %221 = vmatprep.subr.mxu0 0.0
    %222 = vmatpush1.msra.mxu0 0.0
    %223 = vmatprep.subr.mxu0 0.0
    %224 = vmatpush1.msra.mxu0 0.0
    %225 = vmatprep.subr.mxu0 0.0
    %226 = vmatpush1.msra.mxu0 0.0
    %227 = vmatprep.subr.mxu0 0.0
    %228 = vmatpush1.msra.mxu0 0.0
    %229 = vmatprep.mubr.f32.mxu0 0.0
    %230 = vmatmul.mubr.f32.gmra.mrb[0].mxu0 %v163
    %v231 = vpop.f32.mrb[0].mxu0
    %v232 = vadd.f32 %v159, %v231
    %v233 = vpop.f32.mrb[0].mxu0
    %234 = vdwg.mxu0
    %v235 = vmax.f32 %v232, 0.0
    %s236 = scalar_lea.vmem [#allocation2], 96
    %v237 = vld [vmem:[%s236] sm:$0xff]
    %v238 = vld [vmem:[%s236 + $0x8] sm:$0xff]
    %v239 = vld [vmem:[%s236 + $0x10] sm:$0xff]
    %v240 = vld [vmem:[%s236 + $0x18] sm:$0xff]
    %v241 = vld [vmem:[%s236 + $0x20] sm:$0xff]
    %v242 = vld [vmem:[%s236 + $0x28] sm:$0xff]
    %v243 = vld [vmem:[%s236 + $0x30] sm:$0xff]
    %v244 = vld [vmem:[%s236 + $0x38] sm:$0xff]
    %v245 = vld [vmem:[%s236 + $0x40] sm:$0xff]
    %v246 = vld [vmem:[%s236 + $0x48] sm:$0xff]
    %v247 = vld [vmem:[%s236 + $0x50] sm:$0xff]
    %v248 = vld [vmem:[%s236 + $0x58] sm:$0xff]
    %s249 = scalar_lea.vmem %s4, 1
    %v250 = vld [vmem:[%s249] sm:$0x1]
    %v252 = vlaneseq
    %v253 = vshrl.u32 %v252, 7
    %v254 = vsub.s32 0, %v253
    %v255 = vrot.slane %v250, %v254
    %v258 = vsel %vm161, %v235, 0
    %260 = vmatprep.subr.mxu0 0.0
    %261 = vmatpush1.msra.mxu0 %v237
    %262 = vmatprep.subr.mxu0 0.0
    %263 = vmatpush1.msra.mxu0 %v238
    %264 = vmatprep.subr.mxu0 0.0
    %265 = vmatpush1.msra.mxu0 %v239
    %266 = vmatprep.subr.mxu0 0.0
    %267 = vmatpush1.msra.mxu0 %v240
    %268 = vmatprep.subr.mxu0 0.0
    %269 = vmatpush1.msra.mxu0 %v241
    %270 = vmatprep.subr.mxu0 0.0
    %271 = vmatpush1.msra.mxu0 %v242
    %272 = vmatprep.subr.mxu0 0.0
    %273 = vmatpush1.msra.mxu0 %v243
    %274 = vmatprep.subr.mxu0 0.0
    %275 = vmatpush1.msra.mxu0 %v244
    %276 = vmatprep.subr.mxu0 0.0
    %277 = vmatpush1.msra.mxu0 %v245
    %278 = vmatprep.subr.mxu0 0.0
    %279 = vmatpush1.msra.mxu0 %v246
    %280 = vmatprep.subr.mxu0 0.0
    %281 = vmatpush1.msra.mxu0 %v247
    %282 = vmatprep.subr.mxu0 0.0
    %283 = vmatpush1.msra.mxu0 %v248
    %284 = vmatprep.subr.mxu0 0.0
    %285 = vmatpush1.msra.mxu0 0.0
    %286 = vmatprep.subr.mxu0 0.0
    %287 = vmatpush1.msra.mxu0 0.0
    %288 = vmatprep.subr.mxu0 0.0
    %289 = vmatpush1.msra.mxu0 0.0
    %290 = vmatprep.subr.mxu0 0.0
    %291 = vmatpush1.msra.mxu0 0.0
    %292 = vmatprep.subr.mxu0 0.0
    %293 = vmatpush1.msra.mxu0 0.0
    %294 = vmatprep.subr.mxu0 0.0
    %295 = vmatpush1.msra.mxu0 0.0
    %296 = vmatprep.subr.mxu0 0.0
    %297 = vmatpush1.msra.mxu0 0.0
    %298 = vmatprep.subr.mxu0 0.0
    %299 = vmatpush1.msra.mxu0 0.0
    %300 = vmatprep.subr.mxu0 0.0
    %301 = vmatpush1.msra.mxu0 0.0
    %302 = vmatprep.subr.mxu0 0.0
    %303 = vmatpush1.msra.mxu0 0.0
    %304 = vmatprep.subr.mxu0 0.0
    %305 = vmatpush1.msra.mxu0 0.0
    %306 = vmatprep.subr.mxu0 0.0
    %307 = vmatpush1.msra.mxu0 0.0
    %308 = vmatprep.subr.mxu0 0.0
    %309 = vmatpush1.msra.mxu0 0.0
    %310 = vmatprep.subr.mxu0 0.0
    %311 = vmatpush1.msra.mxu0 0.0
    %312 = vmatprep.subr.mxu0 0.0
    %313 = vmatpush1.msra.mxu0 0.0
    %314 = vmatprep.subr.mxu0 0.0
    %315 = vmatpush1.msra.mxu0 0.0
    %316 = vmatprep.subr.mxu0 0.0
    %317 = vmatpush1.msra.mxu0 0.0
    %318 = vmatprep.subr.mxu0 0.0
    %319 = vmatpush1.msra.mxu0 0.0
    %320 = vmatprep.subr.mxu0 0.0
    %321 = vmatpush1.msra.mxu0 0.0
    %322 = vmatprep.subr.mxu0 0.0
    %323 = vmatpush1.msra.mxu0 0.0
    %324 = vmatprep.mubr.f32.mxu0 0.0
    %325 = vmatmul.mubr.f32.gmra.mrb[0].mxu0 %v258
    %v326 = vpop.f32.mrb[0].mxu0
    %v327 = vadd.f32 %v255, %v326
    %v328 = vpop.f32.mrb[0].mxu0
    %329 = vdwg.mxu0
    %v330 = vmax.f32 %v327, 0.0
    %v331 = vld [vmem:[#allocation5] sm:$0xff]
    %v332 = vld [vmem:[#allocation5 + $0x8] sm:$0xff]
    %v333 = vld [vmem:[#allocation5 + $0x10] sm:$0xff]
    %v334 = vld [vmem:[#allocation5 + $0x18] sm:$0xff]
    %v335 = vld [vmem:[#allocation5 + $0x20] sm:$0xff]
    %v336 = vld [vmem:[#allocation5 + $0x28] sm:$0xff]
    %v337 = vld [vmem:[#allocation5 + $0x30] sm:$0xff]
    %v338 = vld [vmem:[#allocation5 + $0x38] sm:$0xff]
    %v339 = vld [vmem:[#allocation5 + $0x40] sm:$0xff]
    %v340 = vld [vmem:[#allocation5 + $0x48] sm:$0xff]
    %v341 = vld [vmem:[#allocation5 + $0x50] sm:$0xff]
    %v342 = vld [vmem:[#allocation5 + $0x58] sm:$0xff]
    %v343 = vld [vmem:[%s6] sm:$0x1]
    %v345 = vlaneseq
    %v346 = vshrl.u32 %v345, 7
    %v347 = vsub.s32 0, %v346
    %v348 = vrot.slane %v343, %v347
    %v351 = vsel %vm161, %v330, 0
    %353 = vmatprep.subr.mxu0 0.0
    %354 = vmatpush1.msra.mxu0 %v331
    %355 = vmatprep.subr.mxu0 0.0
    %356 = vmatpush1.msra.mxu0 %v332
    %357 = vmatprep.subr.mxu0 0.0
    %358 = vmatpush1.msra.mxu0 %v333
    %359 = vmatprep.subr.mxu0 0.0
    %360 = vmatpush1.msra.mxu0 %v334
    %361 = vmatprep.subr.mxu0 0.0
    %362 = vmatpush1.msra.mxu0 %v335
    %363 = vmatprep.subr.mxu0 0.0
    %364 = vmatpush1.msra.mxu0 %v336
    %365 = vmatprep.subr.mxu0 0.0
    %366 = vmatpush1.msra.mxu0 %v337
    %367 = vmatprep.subr.mxu0 0.0
    %368 = vmatpush1.msra.mxu0 %v338
    %369 = vmatprep.subr.mxu0 0.0
    %370 = vmatpush1.msra.mxu0 %v339
    %371 = vmatprep.subr.mxu0 0.0
    %372 = vmatpush1.msra.mxu0 %v340
    %373 = vmatprep.subr.mxu0 0.0
    %374 = vmatpush1.msra.mxu0 %v341
    %375 = vmatprep.subr.mxu0 0.0
    %376 = vmatpush1.msra.mxu0 %v342
    %377 = vmatprep.subr.mxu0 0.0
    %378 = vmatpush1.msra.mxu0 0.0
    %379 = vmatprep.subr.mxu0 0.0
    %380 = vmatpush1.msra.mxu0 0.0
    %381 = vmatprep.subr.mxu0 0.0
    %382 = vmatpush1.msra.mxu0 0.0
    %383 = vmatprep.subr.mxu0 0.0
    %384 = vmatpush1.msra.mxu0 0.0
    %385 = vmatprep.subr.mxu0 0.0
    %386 = vmatpush1.msra.mxu0 0.0
    %387 = vmatprep.subr.mxu0 0.0
    %388 = vmatpush1.msra.mxu0 0.0
    %389 = vmatprep.subr.mxu0 0.0
    %390 = vmatpush1.msra.mxu0 0.0
    %391 = vmatprep.subr.mxu0 0.0
    %392 = vmatpush1.msra.mxu0 0.0
    %393 = vmatprep.subr.mxu0 0.0
    %394 = vmatpush1.msra.mxu0 0.0
    %395 = vmatprep.subr.mxu0 0.0
    %396 = vmatpush1.msra.mxu0 0.0
    %397 = vmatprep.subr.mxu0 0.0
    %398 = vmatpush1.msra.mxu0 0.0
    %399 = vmatprep.subr.mxu0 0.0
    %400 = vmatpush1.msra.mxu0 0.0
    %401 = vmatprep.subr.mxu0 0.0
    %402 = vmatpush1.msra.mxu0 0.0
    %403 = vmatprep.subr.mxu0 0.0
    %404 = vmatpush1.msra.mxu0 0.0
    %405 = vmatprep.subr.mxu0 0.0
    %406 = vmatpush1.msra.mxu0 0.0
    %407 = vmatprep.subr.mxu0 0.0
    %408 = vmatpush1.msra.mxu0 0.0
    %409 = vmatprep.subr.mxu0 0.0
    %410 = vmatpush1.msra.mxu0 0.0
    %411 = vmatprep.subr.mxu0 0.0
    %412 = vmatpush1.msra.mxu0 0.0
    %413 = vmatprep.subr.mxu0 0.0
    %414 = vmatpush1.msra.mxu0 0.0
    %415 = vmatprep.subr.mxu0 0.0
    %416 = vmatpush1.msra.mxu0 0.0
    %417 = vmatprep.mubr.f32.mxu0 0.0
    %418 = vmatmul.mubr.f32.gmra.mrb[0].mxu0 %v351
    %v419 = vpop.f32.mrb[0].mxu0
    %v420 = vadd.f32 %v348, %v419
    %v421 = vpop.f32.mrb[0].mxu0
    %422 = vdwg.mxu0
    %423 = vst [vmem:[#allocation7] sm:$0xff] %v420
    // Predicated region
    $region38: #{ensemble_forward.1} parent=1 // pred_check
      _
    $region39: #{ensemble_forward.1} parent=1 // pred_check_branch
      %425 = sbr.rel (0) target = $region41
    $region40: #{ensemble_forward.1} parent=1 // pred_region
      %s427 = ssub.s32 128, 128
      %428 = vsyncadd [#allocation4], %s427
      %s430 = sshll.u32 [#allocation7], 4
      %s431 = int_to_ptr.vmem [resolvable:$true] %s430
      %433 = dma.vmem_to_hbm [thread:$0]  %s431, 128, %s7, [#allocation4]
    $region41: #{ensemble_forward.1} parent=1 // pred_fallthru
      _
    // Predicated region
    $region42: #{ensemble_forward.1} parent=1 // pred_check
      _
    $region43: #{ensemble_forward.1} parent=1 // pred_check_branch
      %435 = sbr.rel (0) target = $region45
    $region44: #{ensemble_forward.1} parent=1 // pred_region
      %436 = dma.done [#allocation4], 128
    $region45: #{ensemble_forward.1} parent=1 // pred_fallthru
      _
    %437 = vsyncpa [#allocation3], 1
    %438 = vsyncpa [#allocation6], 1
    %439 = vsyncpa [#allocation4], 1

</llo_original>
